<compile_context>
chip_gen: v5e
topology: v5e:2x2
jax: 0.10.0
libtpu: 0.0.40
codegen_flags: <defaults>
</compile_context>

<pallas_src>
import functools

import jax
import jax.numpy as jnp
from jax.experimental import pallas as pl
from jax.experimental.pallas import tpu as pltpu


# ----------------------------- Pallas kernels -----------------------------

def _ova_prompt_kernel(q_ref, nk_ref, p_ref, o_ref, *, f, pool_rows):
    """Fused prompt read-out for one (batch-row, L*D-lane) tile.

    q_ref  : (TB, Kd_p)       f32   query rows (zero-padded rows are harmless)
    nk_ref : (pool_p, Kd_p)   bf16  PRE-normalized prompt keys (padded rows zero)
    p_ref  : (pool_p, TLD)    bf16  flattened-prompt lane tile
    o_ref  : (TB, TLD)        bf16  weighted prompt read-out tile
    f      : static int, number of valid pool rows ( == K[:f] / p[:f] )
    """
    q = q_ref[...]
    # Row-wise L2 normalize (== F.normalize(..., dim=1), eps=1e-12):
    #   x / max(||x||, 1e-12)  ==  x * rsqrt(max(||x||^2, 1e-24))
    # rsqrt runs on the EUP slot; zero (padding) rows stay exactly zero.
    q_n = q * jax.lax.rsqrt(jnp.maximum(jnp.sum(q * q, axis=-1, keepdims=True), 1e-24))

    # Cosine similarities: contract on key_d (last dim of both) -> no transpose
    # materialization; bf16 operands, f32 accumulation on the MXU.
    qk = jax.lax.dot_general(
        q_n.astype(jnp.bfloat16), nk_ref[...],
        dimension_numbers=(((1,), (1,)), ((), ())),
        preferred_element_type=jnp.float32)                      # (TB, pool_p)

    # Exactly reproduce the K[:f] / p[:f] slice of the torch module without
    # ever copying the tables: zero the contributions of rows >= f.
    if f < pool_rows:
        col = jax.lax.broadcasted_iota(jnp.int32, qk.shape, 1)
        qk = qk * (col < f).astype(jnp.float32)

    # Weighted prompt read-out: (TB, pool) @ (pool, TLD) -> lane-dense bf16 store.
    o_ref[...] = jax.lax.dot_general(
        qk.astype(jnp.bfloat16), p_ref[...],
        dimension_numbers=(((1,), (0,)), ((), ())),
        preferred_element_type=jnp.float32).astype(o_ref.dtype)


def _ortho_loss_kernel(k_ref, a_ref, p_ref, o_ref, *, f):
    """ortho_penalty(K) + ortho_penalty(A) + ortho_penalty(p_flat), fused.

    ortho_penalty(t) = mean((t @ t.T - I)^2)
                     = (sum(G*G) - 2*trace(G) + n) / n^2,   G = t @ t.T
    with trace(t @ t.T) == sum(t*t)  (no iota / identity materialization).

    k_ref : (f, Kd)          f32   exact K[:f]
    a_ref : (f, Kd)          f32   exact A[:f]
    p_ref : (pool_p, LD_p)   bf16  padded prompt table; rows >= f masked here
    o_ref : (1, 1)           f32
    """
    def penalty(t, n_eff):
        g = jax.lax.dot_general(
            t, t, dimension_numbers=(((1,), (1,)), ((), ())),
            preferred_element_type=jnp.float32)                  # (R, R)
        sgg = jnp.sum(jnp.sum(g * g, axis=1, keepdims=True), axis=0, keepdims=True)
        tf = t.astype(jnp.float32)
        trg = jnp.sum(jnp.sum(tf * tf, axis=1, keepdims=True), axis=0, keepdims=True)
        return (sgg - 2.0 * trg + float(n_eff)) / float(n_eff * n_eff)   # (1, 1)

    k = k_ref[...]
    a = a_ref[...]
    p = p_ref[...]
    if f < p.shape[0]:
        row = jax.lax.broadcasted_iota(jnp.int32, (p.shape[0], 1), 0)
        p = p * (row < f).astype(p.dtype)

    o_ref[...] = penalty(k, k.shape[0]) + penalty(a, a.shape[0]) + penalty(p, f)


# ----------------------------- small helpers -----------------------------

def _round_up(x, m):
    return ((x + m - 1) // m) * m


def _pad2(a, rows, cols, dtype):
    """Cast + zero-pad a 2-D array up to (rows, cols)."""
    a = jnp.asarray(a, dtype)
    r, c = a.shape
    if (r, c) == (rows, cols):
        return a
    return jnp.pad(a, ((0, rows - r), (0, cols - c)))


def _vmem_capacity_bytes():
    """Per-core VMEM capacity with a safe fallback (v7x has only 64 MiB)."""
    try:
        info = pltpu.get_tpu_info()
        cap = int(getattr(info, "vmem_capacity_bytes", 0) or 0)
        if cap > 0:
            return cap
    except Exception:
        pass
    return 64 << 20


def _pick_ld_tile(ld_pad, prefer_split):
    """Largest 128-multiple tile <= 2048 that divides ld_pad; if the whole
    extent is one tile and we want >=2 grid steps (small batch on v7x),
    fall back to the largest proper divisor."""
    n = ld_pad // 128
    divisors = [t for t in range(1, n + 1) if n % t == 0 and 128 * t <= 2048]
    tld = 128 * max(divisors)
    if prefer_split and tld == ld_pad and len(divisors) > 1:
        tld = 128 * max(t for t in divisors if 128 * t < ld_pad)
    return tld


# ----------------------------- Pallas wrappers -----------------------------

def ova_prompt_select(x_querry, nk_pad, p_pad, *, f, ld_valid,
                      out_dtype=jnp.bfloat16):
    """Fused OVAPrompt read-out.  Returns (B, ld_valid) in out_dtype.

    x_querry : (B, key_d)          f32
    nk_pad   : (pool_p, Kd_p)      bf16  pre-normalized, pre-padded keys
    p_pad    : (pool_p, LD_p)      bf16  pre-padded flattened prompts
    f        : static Python int   number of valid pool rows (== [:f])
    """
    B, Kd = x_querry.shape
    pool_p, Kd_p = nk_pad.shape
    pool_p2, LD_p = p_pad.shape
    assert pool_p == pool_p2 and Kd <= Kd_p

    # Row tile: 256 fills v6e/v7x's 2x256 MXU when B is large; 16-aligned
    # otherwise (bf16 output packs 16 rows per sublane tile).
    if B >= 256:
        TB = 256
    elif B >= 128:
        TB = 128
    else:
        TB = _round_up(B, 16)
    B_p = _round_up(B, TB)
    nb = B_p // TB

    # Lane tile over L*D: keeps every block small on v7x's 64 MiB VMEM and
    # guarantees its two TensorCores both get work even at tiny B.
    TLD = _pick_ld_tile(LD_p, prefer_split=(nb == 1))
    n_ld = LD_p // TLD

    # Only the (cheap) query needs per-call padding; the tables are pre-padded.
    q_pad = x_querry.astype(jnp.float32)
    if (B_p, Kd_p) != (B, Kd):
        q_pad = jnp.pad(q_pad, ((0, B_p - B), (0, Kd_p - Kd)))

    # VMEM budget: every block is double-buffered by the pipeline.
    out_isz = jnp.dtype(out_dtype).itemsize
    blk_bytes = (TB * Kd_p * 4 + pool_p * Kd_p * 2
                 + pool_p * TLD * 2 + TB * TLD * out_isz)
    vmem_need = 2 * blk_bytes
    cap = _vmem_capacity_bytes()
    vmem_limit = int(min(max(vmem_need + (4 << 20), 16 << 20), (cap * 3) // 4))

    kernel = functools.partial(_ova_prompt_kernel, f=f, pool_rows=pool_p)
    out = pl.pallas_call(
        kernel,
        out_shape=jax.ShapeDtypeStruct((B_p, LD_p), out_dtype),
        grid=(nb, n_ld),
        in_specs=[
            pl.BlockSpec((TB, Kd_p), lambda i, j: (i, 0)),       # query rows
            pl.BlockSpec((pool_p, Kd_p), lambda i, j: (0, 0)),   # keys (resident)
            pl.BlockSpec((pool_p, TLD), lambda i, j: (0, j)),    # prompt lanes
        ],
        out_specs=pl.BlockSpec((TB, TLD), lambda i, j: (i, j)),
        compiler_params=pltpu.CompilerParams(
            dimension_semantics=("parallel", "parallel"),        # megacore on v7x
            vmem_limit_bytes=vmem_limit,
        ),
    )(q_pad, nk_pad, p_pad)

    return out[:B, :ld_valid]


def ortho_penalties(K_f, A_f, p_pad, *, f):
    """Fused sum of the three orthogonality penalties (training-only scalar).

    K_f, A_f : exact [:f] slices, f32 (tiny).  p_pad: stored bf16 padded table
    (no f32 astype copy); rows >= f are masked inside the kernel.
    """
    vmem_need = 2 * (K_f.size * 4 + A_f.size * 4 + p_pad.size * 2) + (8 << 20)
    cap = _vmem_capacity_bytes()
    vmem_limit = int(min(max(vmem_need, 16 << 20), (cap * 3) // 4))

    kernel = functools.partial(_ortho_loss_kernel, f=f)
    out = pl.pallas_call(
        kernel,
        out_shape=jax.ShapeDtypeStruct((1, 1), jnp.float32),
        in_specs=[pl.BlockSpec(memory_space=pltpu.MemorySpace.VMEM)] * 3,
        out_specs=pl.BlockSpec(memory_space=pltpu.MemorySpace.VMEM),
        compiler_params=pltpu.CompilerParams(vmem_limit_bytes=vmem_limit),
    )(K_f, A_f, p_pad)
    return out[0, 0]


# ------------------------------ OVAPrompt (JAX) ------------------------------

def _orthonormal_rows(key, n, d):
    """n orthonormal rows of dimension d (QR of a random normal matrix).

    Stand-in for the module's randomized Gram-Schmidt init of the current
    task's slice (rows beyond the current task slice are zero, as in torch).
    """
    assert d >= n
    m = jax.random.normal(key, (d, n), dtype=jnp.float32)
    q, _ = jnp.linalg.qr(m)           # (d, n), orthonormal columns
    return q.T                        # (n, d), orthonormal rows


class OVAPromptPallas:
    """Pallas/TPU port of OVAPrompt (forward pass)."""

    def __init__(self, emb_d, n_tasks, prompt_param, key_dim=768, seed=0):
        self.task_count = 0
        self.emb_d = emb_d
        self.key_d = key_dim
        self.n_tasks = n_tasks
        self.e_pool_size = int(prompt_param[0])
        self.e_p_length = int(prompt_param[1])
        self.ortho_mu = float(prompt_param[2])
        self.threshold = float(prompt_param[-1])
        self.e_layers = [0, 1, 2, 3, 4]
        self.ortho_prj_once = False
        self.ortho_prj_twice = False
        assert self.e_pool_size % self.n_tasks == 0

        pt = self.e_pool_size // self.n_tasks
        L, D, Kd, pool = self.e_p_length, emb_d, key_dim, self.e_pool_size
        self.LD = L * D
        # Padded table shapes (computed ONCE; zero rows/cols are exact no-ops).
        self.pool_p = _round_up(pool, 16)       # bf16 packs 16 rows / sublane tile
        self.Kd_p = _round_up(Kd, 128)
        self.LD_p = _round_up(self.LD, 128)

        key = jax.random.PRNGKey(seed)
        self.params = {}    # raw f32 parameters (source of truth, ortho loss)
        self.tables = {}    # pre-normalized / pre-padded bf16 read-out tables
        for e in self.e_layers:
            key, kp, kk, ka = jax.random.split(key, 4)
            p0 = _orthonormal_rows(kp, pt, self.LD).reshape(pt, L, D)
            k0 = _orthonormal_rows(kk, pt, Kd)
            a0 = _orthonormal_rows(ka, pt, Kd)
            self.params[f'e_p_{e}'] = jnp.zeros((pool, L, D), jnp.float32).at[:pt].set(p0)
            self.params[f'e_k_{e}'] = jnp.zeros((pool, Kd), jnp.float32).at[:pt].set(k0)
            self.params[f'e_a_{e}'] = jnp.zeros((pool, Kd), jnp.float32).at[:pt].set(a0)
            self._refresh_tables(e)

    def _refresh_tables(self, e):
        """(Re)build the padded bf16 HBM tables from the raw f32 parameters.

        Runs once per init / process_task_count — never per forward call — so
        the forward path makes zero HBM copies of the key / prompt tables.
        K is pre-normalized here (hoisted out of the kernel body)."""
        K = self.params[f'e_k_{e}']
        p = self.params[f'e_p_{e}']
        nK = K * jax.lax.rsqrt(jnp.maximum(jnp.sum(K * K, axis=1, keepdims=True), 1e-24))
        self.tables[f'nk_{e}'] = _pad2(nK, self.pool_p, self.Kd_p, jnp.bfloat16)
        self.tables[f'p_{e}'] = _pad2(p.reshape(self.e_pool_size, self.LD),
                                      self.pool_p, self.LD_p, jnp.bfloat16)

    def process_task_count(self):
        # TODO(synk): randomized Gram-Schmidt re-orthonormalization of the new
        # task slice is host-side parameter management, not forward compute.
        self.task_count += 1
        self.ortho_prj_once = False
        for e in self.e_layers:
            self._refresh_tables(e)

    def forward(self, x_querry, l, x_block, train=False, task_id=None,
                ortho_n_fix=False, maml=False, memQ=None):
        # TODO(synk): ortho_n_fix / maml paths require torch.linalg.svd over a
        # host-assembled replay dict (compute_subspace); not ported.
        if l not in self.e_layers:
            return None, jnp.zeros((), jnp.float32), x_block

        pt = self.e_pool_size // self.n_tasks
        f = (self.task_count + 1) * pt           # static Python int
        # Forward-only note: the train/eval branches of the torch module both
        # reduce to rows [0:f] (.detach()/clone only affect autograd); rows >= f
        # are masked inside the kernel, so no [:f] slice copy is made here.
        L, D = self.e_p_length, self.emb_d
        B = x_querry.shape[0]

        P_flat = ova_prompt_select(x_querry, self.tables[f'nk_{l}'],
                                   self.tables[f'p_{l}'], f=f, ld_valid=self.LD)
        P_ = P_flat.reshape(B, L, D)
        i = L // 2
        Ek, Ev = P_[:, :i, :], P_[:, i:, :]

        if train and self.ortho_mu > 0:
            K_f = self.params[f'e_k_{l}'][:f]     # tiny f32 slices (exact penalty)
            A_f = self.params[f'e_a_{l}'][:f]
            # Prompt-table penalty uses the stored bf16 table (deliberate
            # precision trade-off; avoids a full f32 HBM copy of the table).
            loss = self.ortho_mu * ortho_penalties(K_f, A_f, self.tables[f'p_{l}'], f=f)
        else:
            loss = jnp.zeros((), jnp.float32)

        return [Ek, Ev], loss, x_block

    __call__ = forward


# ------------------------------- reference -------------------------------

def _ref_prompt_select(x_querry, K, p):
    """Pure-JAX f32 reference of the OVAPrompt read-out (p: (pool, L, D))."""
    eps = 1e-12
    n_K = K / jnp.maximum(jnp.linalg.norm(K, axis=1, keepdims=True), eps)
    n_q = x_querry / jnp.maximum(jnp.linalg.norm(x_querry, axis=1, keepdims=True), eps)
    q_k = jnp.einsum('bd,kd->bk', n_q, n_K)
    return jnp.einsum('bk,kld->bld', q_k, p)


# --------------------------------- main ---------------------------------

if __name__ == "__main__":
    emb_d = 128
    key_d = 128
    n_tasks = 4
    prompt_param = [16, 8, 0.1, 0.975]   # [e_pool_size, e_p_length, ortho_mu, threshold]

    model = OVAPromptPallas(emb_d, n_tasks, prompt_param, key_dim=key_d, seed=0)

    key = jax.random.PRNGKey(0)
    kq, kb = jax.random.split(key)
    B = 2
    x_querry = jax.random.normal(kq, (B, key_d), dtype=jnp.float32)
    x_block = jax.random.normal(kb, (B, 8, emb_d), dtype=jnp.float32)

    # --- eval path on a prompted layer ---
    p_ret, loss, xb = model(x_querry, 0, x_block)
    Ek, Ev = p_ret
    jax.block_until_ready(Ek)
    jax.block_until_ready(Ev)
    L_half = prompt_param[1] // 2
    assert Ek.shape == (B, L_half, emb_d) and Ev.shape == (B, L_half, emb_d)
    assert Ek.dtype == jnp.bfloat16          # bf16 read-out (deliberate choice)
    assert xb is x_block
    assert float(loss) == 0.0

    # correctness vs pure-JAX f32 reference (bf16 MXU operands + bf16 store)
    pt = model.e_pool_size // model.n_tasks
    f = (model.task_count + 1) * pt
    K0 = model.params['e_k_0'][:f]
    p0 = model.params['e_p_0'][:f]
    P_ref = _ref_prompt_select(x_querry, K0, p0)
    P_got = jnp.concatenate([Ek, Ev], axis=1).astype(jnp.float32)
    assert bool(jnp.allclose(P_got, P_ref, atol=1e-2, rtol=5e-2)), "mismatch vs reference"

    # --- train path (exercises the fused ortho-penalty kernel) ---
    p_ret_t, loss_t, _ = model(x_querry, 1, x_block, train=True)
    jax.block_until_ready(loss_t)
    assert bool(jnp.isfinite(loss_t))

    # --- non-prompted layer passes x_block through untouched ---
    p_none, loss0, xb2 = model(x_querry, 7, x_block)
    assert p_none is None and float(loss0) == 0.0 and xb2 is x_block

    print("KERNEL_OK")
</pallas_src>

<mosaic_0001>
module attributes {stable_mosaic.version = 11 : i64} {
  func.func @_ova_prompt_kernel(%arg0: i32, %arg1: i32, %arg2: memref<16x128xf32, #tpu.memory_space<vmem>>, %arg3: memref<16x128xbf16, #tpu.memory_space<vmem>>, %arg4: memref<16x512xbf16, #tpu.memory_space<vmem>>, %arg5: memref<16x512xbf16, #tpu.memory_space<vmem>>) attributes {dimension_semantics = [#tpu.dimension_semantics<parallel>, #tpu.dimension_semantics<parallel>], iteration_bounds = array<i64: 1, 2>, scalar_prefetch = 0 : i64, scratch_operands = 0 : i64, tpu.core_type = #tpu.core_type<tc>, window_params = [{transform_indices = @transform_0, window_bounds = array<i64: 16, 128>}, {pipeline_mode = #tpu.pipeline_mode<synchronous>, transform_indices = @transform_1, window_bounds = array<i64: 16, 128>}, {transform_indices = @transform_2, window_bounds = array<i64: 16, 512>}, {transform_indices = @transform_3, window_bounds = array<i64: 16, 512>}]} {
    %c0 = arith.constant 0 : index
    %c0_0 = arith.constant 0 : index
    %0 = vector.load %arg2[%c0, %c0_0] : memref<16x128xf32, #tpu.memory_space<vmem>>, vector<16x128xf32>
    %1 = arith.mulf %0, %0 : vector<16x128xf32>
    %cst = arith.constant dense<0.000000e+00> : vector<16xf32>
    %2 = vector.multi_reduction <add>, %1, %cst [1] : vector<16x128xf32> to vector<16xf32>
    %3 = vector.shape_cast %2 : vector<16xf32> to vector<16x1xf32>
    %cst_1 = arith.constant 1.000000e-24 : f32
    %4 = vector.broadcast %cst_1 : f32 to vector<16x1xf32>
    %5 = arith.maximumf %3, %4 : vector<16x1xf32>
    %6 = math.rsqrt %5 : vector<16x1xf32>
    %7 = vector.broadcast %6 : vector<16x1xf32> to vector<16x128xf32>
    %8 = arith.mulf %0, %7 : vector<16x128xf32>
    %9 = arith.truncf %8 : vector<16x128xf32> to vector<16x128xbf16>
    %c0_2 = arith.constant 0 : index
    %c0_3 = arith.constant 0 : index
    %10 = vector.load %arg3[%c0_2, %c0_3] : memref<16x128xbf16, #tpu.memory_space<vmem>>, vector<16x128xbf16>
    %cst_4 = arith.constant dense<0.000000e+00> : vector<16x16xf32>
    %11 = tpu.matmul %9, %10, %cst_4 {dimension_numbers = #tpu.dot_dimension_numbers<[1], [1], [0], [0], [0, 0, 1, 0], [], []>} : vector<16x128xbf16>, vector<16x128xbf16>, vector<16x16xf32> -> vector<16x16xf32>
    %12 = tpu.iota {dimensions = array<i32: 1>} : vector<16x16xi32>
    %c4_i32 = arith.constant 4 : i32
    %13 = vector.broadcast %c4_i32 : i32 to vector<16x16xi32>
    %14 = arith.cmpi slt, %12, %13 : vector<16x16xi32>
    %15 = arith.extui %14 : vector<16x16xi1> to vector<16x16xi32>
    %16 = arith.sitofp %15 : vector<16x16xi32> to vector<16x16xf32>
    %17 = arith.mulf %11, %16 : vector<16x16xf32>
    %18 = arith.truncf %17 : vector<16x16xf32> to vector<16x16xbf16>
    %c0_5 = arith.constant 0 : index
    %c0_6 = arith.constant 0 : index
    %19 = vector.load %arg4[%c0_5, %c0_6] : memref<16x512xbf16, #tpu.memory_space<vmem>>, vector<16x512xbf16>
    %cst_7 = arith.constant dense<0.000000e+00> : vector<16x512xf32>
    %20 = tpu.matmul %18, %19, %cst_7 {dimension_numbers = #tpu.dot_dimension_numbers<[1], [0], [0], [1], [0, 0, 1, 1], [], []>} : vector<16x16xbf16>, vector<16x512xbf16>, vector<16x512xf32> -> vector<16x512xf32>
    %21 = arith.truncf %20 : vector<16x512xf32> to vector<16x512xbf16>
    %c0_8 = arith.constant 0 : index
    %c0_9 = arith.constant 0 : index
    %22 = vector.load %arg5[%c0_8, %c0_9] : memref<16x512xbf16, #tpu.memory_space<vmem>>, vector<16x512xbf16>
    tpu.vector_store %arg5[%c0_8, %c0_9], %21 {strides = array<i32>} : memref<16x512xbf16, #tpu.memory_space<vmem>>, vector<16x512xbf16>,
    return
  }
  func.func @transform_0(%arg0: i32, %arg1: i32) -> (i32, i32) {
    %c0_i32 = arith.constant 0 : i32
    %c0_i32_0 = arith.constant 0 : i32
    return %arg0, %c0_i32 : i32, i32
  }
  func.func @transform_1(%arg0: i32, %arg1: i32) -> (i32, i32) {
    %c0_i32 = arith.constant 0 : i32
    %c0_i32_0 = arith.constant 0 : i32
    %c0_i32_1 = arith.constant 0 : i32
    return %c0_i32, %c0_i32_0 : i32, i32
  }
  func.func @transform_2(%arg0: i32, %arg1: i32) -> (i32, i32) {
    %c0_i32 = arith.constant 0 : i32
    %c0_i32_0 = arith.constant 0 : i32
    return %c0_i32, %arg1 : i32, i32
  }
  func.func @transform_3(%arg0: i32, %arg1: i32) -> (i32, i32) {
    %c0_i32 = arith.constant 0 : i32
    return %arg0, %arg1 : i32, i32
  }
}

</mosaic_0001>

<llo_original>
// kernel: tpu_custom_call.1
$region0: #{tpu_custom_call.1}
  #allocation0 [shape = 'u32[]', space=smem, size = 0x4, offset = 0x4, fixed_abs, tag = 'smem constant byte address 0x4 - core index']
  #allocation1 [shape = 'u32[72,128]{1,0:T(1,128)}', space=vmem, size = 0x9000, scoped, tag = 'internal scratch']
  %s0 = inlined_call_operand.hbm [shape: f32[16,128], index: 0, kind: input, shape index: {}]
  %s1 = inlined_call_operand.hbm [shape: bf16[16,128], index: 1, kind: input, shape index: {}]
  %s2 = inlined_call_operand.hbm [shape: bf16[16,1024], index: 2, kind: input, shape index: {}]
  %s3 = inlined_call_operand.hbm [shape: bf16[16,1024], index: 3, kind: output, shape index: {}]
  %s4 = sld [smem:[#allocation0]]
  $region57: #{tpu_custom_call.1} parent=0
    _
  %s6 = ssub.s32 1, %s4
  %s7 = scalar_select 0, %s6, %s4
  $region1: #{tpu_custom_call.1} parent=0
    #allocation2 [shape = 'u8[8192]{0}', space=vmem, size = 0x2000, scoped, tag = 'input window, operand 0, single buffered']
    #allocation3 [shape = 's32[2]{0}', space=sflag, size = 0x8, scoped, tag = 'scoped memory for tpu_custom_call.1']
    #allocation4 [shape = 's32[2]{0}', space=sflag, size = 0x8, scoped, tag = 'scoped memory for tpu_custom_call.1']
    #allocation5 [shape = 'u8[4096]{0}', space=vmem, size = 0x1000, scoped, tag = 'input window, operand 1, single buffered']
    #allocation6 [shape = 's32[1]{0}', space=sflag, size = 0x4, scoped, tag = 'scoped memory for tpu_custom_call.1']
    #allocation7 [shape = 'u8[32768]{0}', space=vmem, size = 0x8000, scoped, tag = 'input window, operand 2']
    #allocation8 [shape = 'u8[32768]{0}', space=vmem, size = 0x8000, scoped, tag = 'output window, operand 0']
    %8 = vsyncpa [#allocation3], 0
    %9 = vsyncpa [#allocation6], 0
    %10 = vsyncpa [#allocation4], 0
    %s11 = scalar_lea.sflag [#allocation4], 1
    %12 = vsyncpa %s11, 0
    loop: start=0, step=1, limit=4
    $region2: #{tpu_custom_call.1} parent=1 // loop_pre_header
      _
    $region3: #{tpu_custom_call.1} parent=1 // loop_header
      %s14 = sphi 0, %s18
      %p15 = scmp.ge.s32.totalorder %s14, 4
      %s21 = sphi 0, %s33
      %s22 = sphi 0, %s29
      %s23 = sphi 0, %s21
      %s24 = sphi 0, %s22
      %s25 = sphi 0, %s23
      %s26 = sphi 0, %s24
      %s36 = sphi 0, %s38
      %s39 = sphi 0, %s36
      %s40 = sphi 0, %s39
      %s56 = sphi 0, %s40
      %s60 = sphi 0, %s60
      %s62 = sphi 0, %s60
      %s63 = sphi 0, %s62
      %s77 = sphi 0, %s63
      %s83 = sphi 0, %s85
      %s86 = sphi 0, %s83
      %s87 = sphi 0, %s86
      %s103 = sphi 0, %s87
      %s111 = sphi 0, %s113
      %s114 = sphi 0, %s111
      %s115 = sphi 0, %s114
      %s131 = sphi 0, %s115
    $region4: #{tpu_custom_call.1} parent=1 // loop_header_branch
      %17 = sbr.rel (%p15) target = $region8
    $region5: #{tpu_custom_call.1} parent=1 // loop_body
      %s19 = ssub.s32 %s14, 1
      %s20 = ssub.s32 %s14, 2
      %s27 = sadd.s32 1, %s22
      %p28 = scmp.ge.s32.totalorder %s27, 2
      %s29 = scalar_select %p28, 0, %s27
      %s30 = sadd.s32 1, %s21
      %s31 = scalar_select %p28, %s30, %s21
      %p32 = scmp.ge.s32.totalorder %s31, 1
      %s33 = scalar_select %p32, 0, %s31
      %s34 = ssub.s32 %s21, %s33
      %p35 = scmp.eq.s32.totalorder %s34, 0
      %s37 = sadd.s32 %s36, 1
      %s38 = scalar_select %p35, %s36, %s37
      %p41 = pneg %p35
      %p42 = scmp.eq.s32.totalorder %s14, 1
      %p43 = por %p41, %p42
      %p44 = scmp.ne.s32.totalorder %s36, %s39
      %p45 = scmp.eq.s32.totalorder %s14, 0
      %p46 = por %p44, %p45
      %p47 = scmp.ne.s32.totalorder %s36, %s39
      %p48 = scmp.eq.s32.totalorder %s19, 1
      %p49 = por %p47, %p48
      %p50 = scmp.ne.s32.totalorder %s39, %s40
      %p51 = scmp.eq.s32.totalorder %s19, 0
      %p52 = por %p50, %p51
      %p53 = scmp.ne.s32.totalorder %s39, %s40
      %p54 = scmp.eq.s32.totalorder %s20, 1
      %p55 = por %p53, %p54
      %p57 = scmp.ne.s32.totalorder %s40, %s56
      %p58 = scmp.eq.s32.totalorder %s20, 0
      %p59 = por %p57, %p58
      %s61 = sadd.s32 %s60, 1
      %p64 = scmp.eq.s32.totalorder %s14, 1
      %p65 = scmp.ne.s32.totalorder %s60, %s62
      %p66 = scmp.eq.s32.totalorder %s14, 0
      %p67 = por %p65, %p66
      %p68 = scmp.ne.s32.totalorder %s60, %s62
      %p69 = scmp.eq.s32.totalorder %s19, 1
      %p70 = por %p68, %p69
      %p71 = scmp.ne.s32.totalorder %s62, %s63
      %p72 = scmp.eq.s32.totalorder %s19, 0
      %p73 = por %p71, %p72
      %p74 = scmp.ne.s32.totalorder %s62, %s63
      %p75 = scmp.eq.s32.totalorder %s20, 1
      %p76 = por %p74, %p75
      %p78 = scmp.ne.s32.totalorder %s63, %s77
      %p79 = scmp.eq.s32.totalorder %s20, 0
      %p80 = por %p78, %p79
      %s81 = ssub.s32 %s22, %s29
      %p82 = scmp.eq.s32.totalorder %s81, 0
      %s84 = sadd.s32 %s83, 1
      %s85 = scalar_select %p82, %s83, %s84
      %p88 = pneg %p82
      %p89 = scmp.eq.s32.totalorder %s14, 1
      %p90 = por %p88, %p89
      %p91 = scmp.ne.s32.totalorder %s83, %s86
      %p92 = scmp.eq.s32.totalorder %s14, 0
      %p93 = por %p91, %p92
      %p94 = scmp.ne.s32.totalorder %s83, %s86
      %p95 = scmp.eq.s32.totalorder %s19, 1
      %p96 = por %p94, %p95
      %p97 = scmp.ne.s32.totalorder %s86, %s87
      %p98 = scmp.eq.s32.totalorder %s19, 0
      %p99 = por %p97, %p98
      %p100 = scmp.ne.s32.totalorder %s86, %s87
      %p101 = scmp.eq.s32.totalorder %s20, 1
      %p102 = por %p100, %p101
      %p104 = scmp.ne.s32.totalorder %s87, %s103
      %p105 = scmp.eq.s32.totalorder %s20, 0
      %p106 = por %p104, %p105
      %s107 = ssub.s32 %s21, %s33
      %s108 = ssub.s32 %s22, %s29
      %s109 = sor.u32 %s107, %s108
      %p110 = scmp.eq.s32.totalorder %s109, 0
      %s112 = sadd.s32 %s111, 1
      %s113 = scalar_select %p110, %s111, %s112
      %p116 = pneg %p110
      %p117 = scmp.eq.s32.totalorder %s14, 1
      %p118 = por %p116, %p117
      %p119 = scmp.ne.s32.totalorder %s111, %s114
      %p120 = scmp.eq.s32.totalorder %s14, 0
      %p121 = por %p119, %p120
      %p122 = scmp.ne.s32.totalorder %s111, %s114
      %p123 = scmp.eq.s32.totalorder %s19, 1
      %p124 = por %p122, %p123
      %p125 = scmp.ne.s32.totalorder %s114, %s115
      %p126 = scmp.eq.s32.totalorder %s19, 0
      %p127 = por %p125, %p126
      %p128 = scmp.ne.s32.totalorder %s114, %s115
      %p129 = scmp.eq.s32.totalorder %s20, 1
      %p130 = por %p128, %p129
      %p132 = scmp.ne.s32.totalorder %s115, %s131
      %p133 = scmp.eq.s32.totalorder %s20, 0
      %p134 = por %p132, %p133
      %p135 = scmp.le.s32.totalorder 1, %s14
      %p136 = scmp.lt.s32.totalorder %s14, 3
      %p137 = pnand %p135, %p136
      %p138 = pneg %p137
      // Predicated region
      $region9: #{tpu_custom_call.1} parent=5 // pred_check
        _
      $region10: #{tpu_custom_call.1} parent=5 // pred_check_branch
        %140 = sbr.rel (%p137) target = $region12
      $region11: #{tpu_custom_call.1} parent=5 // pred_region
        %s141 = ssub.s32 %s14, 1
        // Predicated region
        $region13: #{tpu_custom_call.1} parent=11 // pred_check
          %p142 = pneg %p52
        $region14: #{tpu_custom_call.1} parent=11 // pred_check_branch
          %144 = sbr.rel (%p142) target = $region16
        $region15: #{tpu_custom_call.1} parent=11 // pred_region
          %s145 = smul.u32 2, %s23
          %147 = vsyncadd [#allocation3], 0
          %s148 = smul.addr %s145, 8
          %s149 = scalar_lea.hbm %s0, %s148
          %s150 = sshll.u32 %s149, 4
          %s151 = int_to_ptr.hbm [resolvable:$true] %s150
          %s152 = sshll.u32 [#allocation2], 4
          %s153 = int_to_ptr.vmem [resolvable:$true] %s152
          %158 = dma.hbm_to_vmem [thread:$0]  %s151, 256, %s153, [#allocation3], 128, 128, 8
        $region16: #{tpu_custom_call.1} parent=11 // pred_fallthru
          _
        // Predicated region
        $region17: #{tpu_custom_call.1} parent=11 // pred_check
          %p159 = pneg %p73
        $region18: #{tpu_custom_call.1} parent=11 // pred_check_branch
          %161 = sbr.rel (%p159) target = $region20
        $region19: #{tpu_custom_call.1} parent=11 // pred_region
          %163 = vsyncadd [#allocation6], 0
          %s164 = sshll.u32 %s1, 4
          %s165 = int_to_ptr.hbm [resolvable:$true] %s164
          %s166 = sshll.u32 [#allocation5], 4
          %s167 = int_to_ptr.vmem [resolvable:$true] %s166
          %172 = dma.hbm_to_vmem [thread:$0]  %s165, 128, %s167, [#allocation6], 64, 64, 4
        $region20: #{tpu_custom_call.1} parent=11 // pred_fallthru
          _
      $region12: #{tpu_custom_call.1} parent=5 // pred_fallthru
        _
      %p173 = scmp.lt.s32.totalorder %s14, 2
      // Predicated region
      $region21: #{tpu_custom_call.1} parent=5 // pred_check
        %p174 = pneg %p173
      $region22: #{tpu_custom_call.1} parent=5 // pred_check_branch
        %176 = sbr.rel (%p174) target = $region24
      $region23: #{tpu_custom_call.1} parent=5 // pred_region
        // Predicated region
        $region25: #{tpu_custom_call.1} parent=23 // pred_check
          %p177 = pneg %p93
        $region26: #{tpu_custom_call.1} parent=23 // pred_check_branch
          %179 = sbr.rel (%p177) target = $region28
        $region27: #{tpu_custom_call.1} parent=23 // pred_region
          %s180 = sand.u32 %s14, 1
          %s181 = scalar_lea.sflag [#allocation3], %s180
          %s182 = sand.u32 %s83, 1
          %s183 = smul.addr %s182, 32
          %s184 = scalar_lea.vmem [#allocation7], %s183
          %s185 = smul.u32 4, %s22
          %187 = vsyncadd %s181, 0
          %s188 = smul.addr %s185, 4
          %s189 = scalar_lea.hbm %s2, %s188
          %s190 = sshll.u32 %s189, 4
          %s191 = int_to_ptr.hbm [resolvable:$true] %s190
          %s192 = sshll.u32 %s184, 4
          %s193 = int_to_ptr.vmem [resolvable:$true] %s192
          %198 = dma.hbm_to_vmem [thread:$0]  %s191, 512, %s193, %s181, 512, 256, 16
        $region28: #{tpu_custom_call.1} parent=23 // pred_fallthru
          _
      $region24: #{tpu_custom_call.1} parent=5 // pred_fallthru
        _
      %p199 = scmp.le.s32.totalorder 1, %s14
      %p200 = scmp.lt.s32.totalorder %s14, 3
      %p201 = pnand %p199, %p200
      %p202 = pneg %p201
      // Predicated region
      $region29: #{tpu_custom_call.1} parent=5 // pred_check
        _
      $region30: #{tpu_custom_call.1} parent=5 // pred_check_branch
        %204 = sbr.rel (%p201) target = $region32
      $region31: #{tpu_custom_call.1} parent=5 // pred_region
        %s205 = ssub.s32 %s14, 1
        // Predicated region
        $region33: #{tpu_custom_call.1} parent=31 // pred_check
          %p206 = pneg %p52
        $region34: #{tpu_custom_call.1} parent=31 // pred_check_branch
          %208 = sbr.rel (%p206) target = $region36
        $region35: #{tpu_custom_call.1} parent=31 // pred_region
          %210 = dma.done [#allocation3], 256
        $region36: #{tpu_custom_call.1} parent=31 // pred_fallthru
          _
        // Predicated region
        $region37: #{tpu_custom_call.1} parent=31 // pred_check
          %p211 = pneg %p73
        $region38: #{tpu_custom_call.1} parent=31 // pred_check_branch
          %213 = sbr.rel (%p211) target = $region40
        $region39: #{tpu_custom_call.1} parent=31 // pred_region
          %215 = dma.done [#allocation6], 128
        $region40: #{tpu_custom_call.1} parent=31 // pred_fallthru
          _
        %s216 = sand.u32 %s19, 1
        %s217 = scalar_lea.sflag [#allocation3], %s216
        %s218 = sand.u32 %s86, 1
        %s219 = smul.addr %s218, 32
        %s220 = scalar_lea.vmem [#allocation7], %s219
        // Predicated region
        $region41: #{tpu_custom_call.1} parent=31 // pred_check
          %p221 = pneg %p99
        $region42: #{tpu_custom_call.1} parent=31 // pred_check_branch
          %223 = sbr.rel (%p221) target = $region44
        $region43: #{tpu_custom_call.1} parent=31 // pred_region
          %225 = dma.done %s217, 512
        $region44: #{tpu_custom_call.1} parent=31 // pred_fallthru
          _
        %p226 = pneg %p52
        %p227 = pneg %p49
        %p228 = pneg %p73
        %p229 = pneg %p70
        %s230 = sand.u32 %s19, 1
        %s231 = scalar_lea.sflag [#allocation3], %s230
        %s232 = sand.u32 %s86, 1
        %s233 = smul.addr %s232, 32
        %s234 = scalar_lea.vmem [#allocation7], %s233
        %p235 = pneg %p99
        %p236 = pneg %p96
        %p237 = pneg %p127
        %p238 = pneg %p124
        %s239 = sand.u32 %s114, 1
        %s240 = scalar_lea.sflag [#allocation4], %s239
        %s241 = sand.u32 %s114, 1
        %s242 = smul.addr %s241, 32
        %s243 = scalar_lea.vmem [#allocation8], %s242
        %s244 = smul.u32 2, %s23
        %s245 = smul.u32 4, %s24
        %s246 = smul.u32 2, %s23
        %s247 = smul.u32 4, %s24
        %v249 = vld [vmem:[#allocation2] sm:$0xff]
        %v250 = vld [vmem:[#allocation2 + $0x8] sm:$0xff]
        %v251 = vmul.f32 %v249, %v249
        %v252 = vmul.f32 %v250, %v250
        %253 = vadd.xlane.f32.xlu0 %v251
        %v254 = vpop.xlane.xlu0 %253
        %255 = vadd.xlane.f32.xlu0 %v252
        %v256 = vpop.xlane.xlu0 %255
        %v257 = vmax.f32 %v254, 1e-24
        %v258 = vmax.f32 %v256, 1e-24
        %v259 = vrsqrt.pop %v257
        %v260 = vmul.f32 %v259, %v257
        %v261 = vmul.f32 %v260, %v259
        %v262 = vmul.f32 0.5, %v261
        %v263 = vsub.f32 1.5, %v262
        %v264 = vmul.f32 %v259, %v263
        %vm265 = vweird.f32 %v257
        %vm266 = vweird.f32 %v259
        %vm267 = vmor %vm265, %vm266
        %v268 = vsel %vm267, %v259, %v264
        %v269 = vrsqrt.pop %v258
        %v270 = vmul.f32 %v269, %v258
        %v271 = vmul.f32 %v270, %v269
        %v272 = vmul.f32 0.5, %v271
        %v273 = vsub.f32 1.5, %v272
        %v274 = vmul.f32 %v269, %v273
        %vm275 = vweird.f32 %v258
        %vm276 = vweird.f32 %v269
        %vm277 = vmor %vm275, %vm276
        %v278 = vsel %vm277, %v269, %v274
        %v279 = vmul.f32 %v249, %v268
        %v280 = vmul.f32 %v250, %v278
        %v281 = vpack.c.bf16 %v280, %v279
        %v282 = vld [vmem:[#allocation5] sm:$0xf]
        %v283 = vld [vmem:[#allocation5 + $0x4] sm:$0xf]
        %v286 = vunpack.c.l.b16 %v282
        %v287 = vunpack.c.l.b16 %v283
        %v288 = vpack.c.b16 %v287, %v286
        %290 = vmatpush.bf16.xpose.msra.mxu0 0
        %291 = vmatpush.bf16.xpose.msra.mxu0 0
        %292 = vmatpush.bf16.xpose.msra.mxu0 0
        %293 = vmatpush.bf16.xpose.msra.mxu0 0
        %294 = vmatpush.bf16.xpose.msra.mxu0 0
        %295 = vmatpush.bf16.xpose.msra.mxu0 0
        %296 = vmatpush.bf16.xpose.msra.mxu0 0
        %297 = vmatpush.bf16.xpose.msra.mxu0 %v288
        %298 = vmatmul.bf16.gmra.mxu0 %v281
        %v299 = vpop.f32.mrf.mxu0
        %v300 = vadd.f32 0.0, %v299
        %v301 = vpop.f32.mrf.mxu0
        %v302 = vadd.f32 0.0, %v301
        %303 = vdwg.mxu0
        %v304 = vlaneseq
        %v305 = vand.u32 %v304, 127
        %vm306 = vcmp.lt.s32.totalorder %v305, 4
        %v307 = vsel %vm306, 1, 0
        %v308 = vcvt.s32.f32 %v307
        %v309 = vmul.f32 %v300, %v308
        %v310 = vmul.f32 %v302, %v308
        %v311 = vpack.c.bf16 %v310, %v309
        %v312 = vld [vmem:[%s220] sm:$0xff]
        %v313 = vld [vmem:[%s220 + $0x8] sm:$0xff]
        %v314 = vld [vmem:[%s220 + $0x10] sm:$0xff]
        %v315 = vld [vmem:[%s220 + $0x18] sm:$0xff]
        %v320 = vunpack.c.l.b16 %v312
        %v321 = vunpack.c.h.b16 %v312
        %v322 = vunpack.c.l.b16 %v313
        %v323 = vunpack.c.h.b16 %v313
        %v324 = vunpack.c.l.b16 %v314
        %v325 = vunpack.c.h.b16 %v314
        %v326 = vunpack.c.l.b16 %v315
        %v327 = vunpack.c.h.b16 %v315
        %v328 = vpack.c.b16 %v324, %v320
        %v329 = vpack.c.b16 %v325, %v321
        %v330 = vpack.c.b16 %v326, %v322
        %v331 = vpack.c.b16 %v327, %v323
        %vm336 = vcmask 130048
        %v338 = vsel %vm336, %v311, 0
        %340 = vmatpush.bf16.msra.mxu0 0
        %341 = vmatpush.bf16.msra.mxu0 0
        %342 = vmatpush.bf16.msra.mxu0 0
        %343 = vmatpush.bf16.msra.mxu0 0
        %344 = vmatpush.bf16.msra.mxu0 0
        %345 = vmatpush.bf16.msra.mxu0 0
        %346 = vmatpush.bf16.msra.mxu0 0
        %347 = vmatpush.bf16.msra.mxu0 %v328
        %348 = vmatmul.bf16.gmra.mxu0 %v338
        %v349 = vpop.f32.mrf.mxu0
        %v350 = vadd.f32 0.0, %v349
        %v351 = vpop.f32.mrf.mxu0
        %v352 = vadd.f32 0.0, %v351
        %353 = vdwg.mxu0
        %354 = vmatpush.bf16.msra.mxu0 0
        %355 = vmatpush.bf16.msra.mxu0 0
        %356 = vmatpush.bf16.msra.mxu0 0
        %357 = vmatpush.bf16.msra.mxu0 0
        %358 = vmatpush.bf16.msra.mxu0 0
        %359 = vmatpush.bf16.msra.mxu0 0
        %360 = vmatpush.bf16.msra.mxu0 0
        %361 = vmatpush.bf16.msra.mxu0 %v329
        %362 = vmatmul.bf16.gmra.mxu0 %v338
        %v363 = vpop.f32.mrf.mxu0
        %v364 = vadd.f32 0.0, %v363
        %v365 = vpop.f32.mrf.mxu0
        %v366 = vadd.f32 0.0, %v365
        %367 = vdwg.mxu0
        %368 = vmatpush.bf16.msra.mxu0 0
        %369 = vmatpush.bf16.msra.mxu0 0
        %370 = vmatpush.bf16.msra.mxu0 0
        %371 = vmatpush.bf16.msra.mxu0 0
        %372 = vmatpush.bf16.msra.mxu0 0
        %373 = vmatpush.bf16.msra.mxu0 0
        %374 = vmatpush.bf16.msra.mxu0 0
        %375 = vmatpush.bf16.msra.mxu0 %v330
        %376 = vmatmul.bf16.gmra.mxu0 %v338
        %v377 = vpop.f32.mrf.mxu0
        %v378 = vadd.f32 0.0, %v377
        %v379 = vpop.f32.mrf.mxu0
        %v380 = vadd.f32 0.0, %v379
        %381 = vdwg.mxu0
        %382 = vmatpush.bf16.msra.mxu0 0
        %383 = vmatpush.bf16.msra.mxu0 0
        %384 = vmatpush.bf16.msra.mxu0 0
        %385 = vmatpush.bf16.msra.mxu0 0
        %386 = vmatpush.bf16.msra.mxu0 0
        %387 = vmatpush.bf16.msra.mxu0 0
        %388 = vmatpush.bf16.msra.mxu0 0
        %389 = vmatpush.bf16.msra.mxu0 %v331
        %390 = vmatmul.bf16.gmra.mxu0 %v338
        %v391 = vpop.f32.mrf.mxu0
        %v392 = vadd.f32 0.0, %v391
        %v393 = vpop.f32.mrf.mxu0
        %v394 = vadd.f32 0.0, %v393
        %395 = vdwg.mxu0
        %v396 = vpack.c.bf16 %v364, %v350
        %v397 = vpack.c.bf16 %v392, %v378
        %v398 = vpack.c.bf16 %v366, %v352
        %v399 = vpack.c.bf16 %v394, %v380
        %400 = vst [vmem:[%s243] sm:$0xff] %v396
        %401 = vst [vmem:[%s243 + $0x8] sm:$0xff] %v397
        %402 = vst [vmem:[%s243 + $0x10] sm:$0xff] %v398
        %403 = vst [vmem:[%s243 + $0x18] sm:$0xff] %v399
        %s404 = sand.u32 %s114, 1
        %s405 = scalar_lea.sflag [#allocation4], %s404
        %s406 = sand.u32 %s114, 1
        %s407 = smul.addr %s406, 32
        %s408 = scalar_lea.vmem [#allocation8], %s407
        // Predicated region
        $region45: #{tpu_custom_call.1} parent=31 // pred_check
          %p409 = pneg %p124
        $region46: #{tpu_custom_call.1} parent=31 // pred_check_branch
          %411 = sbr.rel (%p409) target = $region48
        $region47: #{tpu_custom_call.1} parent=31 // pred_region
          %s412 = smul.u32 2, %s23
          %s413 = smul.u32 4, %s24
          %415 = vsyncadd %s405, 0
          %s416 = smul.addr %s412, 8
          %s417 = sadd.s32 %s413, %s416
          %s418 = smul.addr %s417, 4
          %s419 = scalar_lea.hbm %s3, %s418
          %s420 = sshll.u32 %s408, 4
          %s421 = int_to_ptr.vmem [resolvable:$true] %s420
          %s422 = sshll.u32 %s419, 4
          %s423 = int_to_ptr.hbm [resolvable:$true] %s422
          %428 = dma.vmem_to_hbm [thread:$0]  %s421, 512, %s423, %s405, 256, 512, 16
        $region48: #{tpu_custom_call.1} parent=31 // pred_fallthru
          _
      $region32: #{tpu_custom_call.1} parent=5 // pred_fallthru
        _
      %p429 = scmp.le.s32.totalorder 2, %s14
      // Predicated region
      $region49: #{tpu_custom_call.1} parent=5 // pred_check
        %p430 = pneg %p429
      $region50: #{tpu_custom_call.1} parent=5 // pred_check_branch
        %432 = sbr.rel (%p430) target = $region52
      $region51: #{tpu_custom_call.1} parent=5 // pred_region
        %s433 = ssub.s32 %s14, 2
        // Predicated region
        $region53: #{tpu_custom_call.1} parent=51 // pred_check
          %p434 = pneg %p130
        $region54: #{tpu_custom_call.1} parent=51 // pred_check_branch
          %436 = sbr.rel (%p434) target = $region56
        $region55: #{tpu_custom_call.1} parent=51 // pred_region
          %s437 = sand.u32 %s115, 1
          %s438 = scalar_lea.sflag [#allocation4], %s437
          %s439 = sand.u32 %s115, 1
          %s440 = smul.addr %s439, 32
          %s441 = scalar_lea.vmem [#allocation8], %s440
          %443 = dma.done %s438, 512
        $region56: #{tpu_custom_call.1} parent=51 // pred_fallthru
          _
      $region52: #{tpu_custom_call.1} parent=5 // pred_fallthru
        _
    $region6: #{tpu_custom_call.1} parent=1 // loop_footer
      %s18 = sadd.s32 1, %s14
    $region7: #{tpu_custom_call.1} parent=1 // loop_footer_branch
      %13 = sbr.rel target = $region3
    $region8: #{tpu_custom_call.1} parent=1 // loop_exit
      _
    %444 = vsyncpa [#allocation3], 1
    %s445 = scalar_lea.sflag [#allocation3], 1
    %446 = vsyncpa %s445, 1
    %447 = vsyncpa [#allocation6], 1
    %448 = vsyncpa [#allocation4], 1
    %s449 = scalar_lea.sflag [#allocation4], 1
    %450 = vsyncpa %s449, 1

</llo_original>
